<compile_context>
chip_gen: v7x
topology: tpu7x:2x2x1
jax: 0.10.0
libtpu: 0.0.40
codegen_flags: <defaults>
</compile_context>

<pallas_src>
import functools
import math

import jax
import jax.numpy as jnp
from jax.experimental import pallas as pl
from jax.experimental.pallas import tpu as pltpu

LANE = 128
FEAT_PAD = 256          # pad all feature dims to multiples of 256 (MXU-friendly)


# ------------------------------ helpers ------------------------------------- #
def _round_up(x, m):
    return ((x + m - 1) // m) * m


def _pick_tile(dim, max_tile, base):
    """Largest multiple of `base` that divides `dim` and is <= max_tile."""
    t = min(max_tile, dim)
    t = max(base, (t // base) * base)
    while dim % t != 0:
        t -= base
    return t


def _vmem_budget_bytes():
    """Per-generation VMEM budget (v7x has 64 MiB/TC, v5e/v6e 128 MiB)."""
    phys = 64 << 20  # conservative default (v7x per-core VMEM)
    try:
        info = pltpu.get_tpu_info()
        phys = int(getattr(info, "vmem_capacity_bytes", phys))
    except Exception:
        pass
    return min(int(phys * 0.7), 100 << 20)


# ----------------------- tiled per-layer GEMM kernel ------------------------- #
def _linear_kernel(x_ref, w_ref, b_ref, o_ref, acc_ref, *, activation):
    """One (TM, TN) tile of act(x @ w + b), accumulated over the K grid axis."""
    k = pl.program_id(2)

    @pl.when(k == 0)
    def _init():
        acc_ref[...] = jnp.zeros_like(acc_ref)

    # f32->bf16 cast of the (first-layer) input is fused here; bf16 x bf16 on
    # the MXU with f32 accumulation.
    acc_ref[...] += jnp.dot(x_ref[...].astype(jnp.bfloat16), w_ref[...],
                            preferred_element_type=jnp.float32)

    @pl.when(k == pl.num_programs(2) - 1)
    def _finalize():
        y = acc_ref[...] + b_ref[...]
        if activation:
            y = jnp.tanh(y)
        o_ref[...] = y.astype(o_ref.dtype)


def pallas_linear(x, w, b, *, activation, out_dtype, vmem_budget):
    """x:(M,K) f32/bf16, w:(K,N) bf16, b:(1,N) f32 -> (M,N) out_dtype."""
    M, K = x.shape
    Kw, N = w.shape
    assert K == Kw and M % 16 == 0 and K % LANE == 0 and N % LANE == 0

    x_bytes = x.dtype.itemsize
    o_bytes = jnp.dtype(out_dtype).itemsize

    base_m = next(bm for bm in (256, 128, 64, 32, 16) if M % bm == 0)
    TM = _pick_tile(M, 512, base_m)
    TN = _pick_tile(N, 512, LANE)
    TK = _pick_tile(K, 2048, LANE)

    def footprint(tm, tn, tk):
        return (2 * tm * tk * x_bytes       # double-buffered activation stream
                + 2 * tk * tn * 2           # double-buffered bf16 weight stream
                + 2 * tn * 4                # bias
                + 2 * tm * tn * o_bytes     # double-buffered output
                + tm * tn * 4)              # f32 accumulator scratch

    while footprint(TM, TN, TK) > vmem_budget:
        if TK > LANE:
            TK = _pick_tile(K, TK - LANE, LANE)
        elif TN > LANE:
            TN = _pick_tile(N, TN - LANE, LANE)
        elif TM > base_m:
            TM = _pick_tile(M, TM - base_m, base_m)
        else:
            break

    # Keep >=2 parallel output tiles so both v7x TensorCores get work.
    if (M // TM) * (N // TN) < 2 and TN >= 2 * LANE:
        TN //= 2

    grid = (M // TM, N // TN, K // TK)

    cost = pl.CostEstimate(
        flops=2 * M * N * K,
        transcendentals=M * N if activation else 0,
        bytes_accessed=M * K * x_bytes + K * N * 2 + N * 4 + M * N * o_bytes)

    kernel = functools.partial(_linear_kernel, activation=activation)
    return pl.pallas_call(
        kernel,
        out_shape=jax.ShapeDtypeStruct((M, N), out_dtype),
        grid_spec=pltpu.PrefetchScalarGridSpec(
            num_scalar_prefetch=0,
            grid=grid,
            in_specs=[
                pl.BlockSpec((TM, TK), lambda i, j, k: (i, k)),   # activations
                pl.BlockSpec((TK, TN), lambda i, j, k: (k, j)),   # weights
                pl.BlockSpec((1, TN), lambda i, j, k: (0, j)),    # bias
            ],
            out_specs=pl.BlockSpec((TM, TN), lambda i, j, k: (i, j)),
            scratch_shapes=[pltpu.VMEM((TM, TN), jnp.float32)],
        ),
        compiler_params=pltpu.CompilerParams(
            dimension_semantics=("parallel", "parallel", "arbitrary"),
            vmem_limit_bytes=vmem_budget),
        cost_estimate=cost,
    )(x, w, b)


# ------------------------- fused whole-MLP kernel ---------------------------- #
def _fused_mlp_kernel(x_ref, *refs, n_layers, in_dim):
    """Whole forward pass for one M tile; weights resident, h stays in VMEM."""
    o_ref = refs[-1]
    h = x_ref[...].astype(jnp.bfloat16)          # f32 -> bf16 fused into kernel
    k_live = in_dim                              # true contraction dim (layer 0)
    for i in range(n_layers):
        w_ref, b_ref = refs[2 * i], refs[2 * i + 1]
        w = w_ref[...] if k_live == w_ref.shape[0] else w_ref[:k_live, :]
        y = jnp.dot(h, w, preferred_element_type=jnp.float32) + b_ref[...]
        if i < n_layers - 1:
            h = jnp.tanh(y).astype(jnp.bfloat16)
            k_live = w_ref.shape[1]
        else:
            o_ref[...] = y.astype(o_ref.dtype)


def pallas_mlp_fused(x, params, *, vmem_budget):
    M, in_dim = x.shape
    Mp = _round_up(M, 16)
    if Mp != M:
        x = jnp.pad(x, ((0, Mp - M), (0, 0)))

    n_layers = len(params)
    N_out = params[-1]["w"].shape[1]
    TM = _pick_tile(Mp, 256, 16)
    grid = (Mp // TM,)

    in_specs = [pl.BlockSpec((TM, in_dim), lambda i: (i, 0))]
    args = [x]
    flops, trans = 0, 0
    bytes_acc = Mp * in_dim * 4 + Mp * N_out * 4
    k_live = in_dim
    for li, layer in enumerate(params):
        w, b = layer["w"], layer["b"]
        Kp, Np = w.shape
        in_specs.append(pl.BlockSpec((Kp, Np), lambda i: (0, 0)))
        in_specs.append(pl.BlockSpec((1, Np), lambda i: (0, 0)))
        args += [w, b]
        flops += 2 * Mp * k_live * Np
        if li < n_layers - 1:
            trans += Mp * Np
        bytes_acc += Kp * Np * 2 + Np * 4
        k_live = Np

    kernel = functools.partial(_fused_mlp_kernel, n_layers=n_layers, in_dim=in_dim)
    return pl.pallas_call(
        kernel,
        out_shape=jax.ShapeDtypeStruct((Mp, N_out), jnp.float32),
        grid_spec=pltpu.PrefetchScalarGridSpec(
            num_scalar_prefetch=0,
            grid=grid,
            in_specs=in_specs,
            out_specs=pl.BlockSpec((TM, N_out), lambda i: (i, 0)),
        ),
        compiler_params=pltpu.CompilerParams(
            dimension_semantics=("parallel",),
            vmem_limit_bytes=vmem_budget),
        cost_estimate=pl.CostEstimate(flops=flops, transcendentals=trans,
                                      bytes_accessed=bytes_acc),
    )(*args)


# --------------------------------- forward ---------------------------------- #
def _use_fused(params):
    wbytes = sum(l["w"].size * l["w"].dtype.itemsize + l["b"].size * 4
                 for l in params)
    widest = max(max(l["w"].shape) for l in params)
    return wbytes <= (8 << 20) and widest <= 2048


def mlp_forward(params, x, out_dim, force_tiled=False):
    M, K = x.shape
    budget = _vmem_budget_bytes()

    if not force_tiled and _use_fused(params):
        y = pallas_mlp_fused(x, params, vmem_budget=budget)
        return y[:M, :out_dim]

    # General path: one tiled GEMM+bias(+tanh) kernel per layer.
    Mp = _round_up(M, 16)
    Kp = params[0]["w"].shape[0]
    h = x
    if (Mp, Kp) != (M, K):
        h = jnp.pad(h, ((0, Mp - M), (0, Kp - K)))
    # NOTE: f32 -> bf16 cast of the input happens inside the first kernel.
    n_layers = len(params)
    for i, layer in enumerate(params):
        last = (i == n_layers - 1)
        h = pallas_linear(
            h, layer["w"], layer["b"],
            activation=not last,
            out_dtype=jnp.float32 if last else jnp.bfloat16,
            vmem_budget=budget)
    return h[:M, :out_dim]


def mlp_reference(params, x):
    """Pure-JAX f32 reference (same math as the PyTorch module)."""
    h = x
    for i, layer in enumerate(params):
        h = h @ layer["w_raw"] + layer["b_raw"]
        if i < len(params) - 1:
            h = jnp.tanh(h)
    return h


# ----------------------------- parameter init ------------------------------- #
def make_mlp_params(key, input_dim, hidden_dims, out_dim):
    """nn.Linear-style init; weights stored as W^T, zero-padded to 256, bf16."""
    dims = [input_dim] + list(hidden_dims) + [out_dim]
    layers = []
    for i in range(len(dims) - 1):
        fan_in, fan_out = dims[i], dims[i + 1]
        key, wk, bk = jax.random.split(key, 3)
        bound = 1.0 / math.sqrt(fan_in)
        w = jax.random.uniform(wk, (fan_in, fan_out), jnp.float32, -bound, bound)
        b = jax.random.uniform(bk, (fan_out,), jnp.float32, -bound, bound)

        kp, npad = _round_up(fan_in, FEAT_PAD), _round_up(fan_out, FEAT_PAD)
        w_p = jnp.zeros((kp, npad), jnp.float32).at[:fan_in, :fan_out].set(w)
        b_p = jnp.zeros((1, npad), jnp.float32).at[0, :fan_out].set(b)
        layers.append({
            "w": w_p.astype(jnp.bfloat16),   # pre-cast once, lane-dense padded
            "b": b_p,                        # f32 bias, added post-accumulation
            "w_raw": w, "b_raw": b,          # f32 originals for the reference
        })
    return layers


# ----------------------------------- main ------------------------------------ #
if __name__ == "__main__":
    key = jax.random.PRNGKey(0)

    # ---- test 1: small demo config -> single fused kernel path ----
    batch, input_dim, hidden_dims, out_dim = 8, 16, (64, 32), 8
    key, pkey, xkey = jax.random.split(key, 3)
    params = make_mlp_params(pkey, input_dim, hidden_dims, out_dim)
    x = jax.random.normal(xkey, (batch, input_dim), jnp.float32)

    fwd = jax.jit(lambda p, xx: mlp_forward(p, xx, out_dim))
    y = jax.block_until_ready(fwd(params, x))
    y_ref = mlp_reference(params, x)
    assert y.shape == (batch, out_dim) and y.dtype == jnp.float32
    assert bool(jnp.all(jnp.isfinite(y)))
    assert bool(jnp.allclose(y, y_ref, atol=5e-2, rtol=5e-2)), \
        f"fused max abs err {float(jnp.max(jnp.abs(y - y_ref)))}"

    # ---- test 2: larger config -> per-layer tiled GEMM path ----
    batch2, input_dim2, hidden2, out_dim2 = 128, 256, (512,), 256
    key, pkey2, xkey2 = jax.random.split(key, 3)
    params2 = make_mlp_params(pkey2, input_dim2, hidden2, out_dim2)
    x2 = jax.random.normal(xkey2, (batch2, input_dim2), jnp.float32)

    fwd2 = jax.jit(lambda p, xx: mlp_forward(p, xx, out_dim2, force_tiled=True))
    y2 = jax.block_until_ready(fwd2(params2, x2))
    y2_ref = mlp_reference(params2, x2)
    assert y2.shape == (batch2, out_dim2) and y2.dtype == jnp.float32
    assert bool(jnp.all(jnp.isfinite(y2)))
    assert bool(jnp.allclose(y2, y2_ref, atol=6e-2, rtol=6e-2)), \
        f"tiled max abs err {float(jnp.max(jnp.abs(y2 - y2_ref)))}"

    print("KERNEL_OK")
</pallas_src>

<mosaic_0001>
module attributes {stable_mosaic.version = 11 : i64} {
  func.func @_fused_mlp_kernel(%arg0: i32, %arg1: memref<16x16xf32, #tpu.memory_space<vmem>>, %arg2: memref<256x256xbf16, #tpu.memory_space<vmem>>, %arg3: memref<1x256xf32, #tpu.memory_space<vmem>>, %arg4: memref<256x256xbf16, #tpu.memory_space<vmem>>, %arg5: memref<1x256xf32, #tpu.memory_space<vmem>>, %arg6: memref<256x256xbf16, #tpu.memory_space<vmem>>, %arg7: memref<1x256xf32, #tpu.memory_space<vmem>>, %arg8: memref<16x256xf32, #tpu.memory_space<vmem>>) attributes {dimension_semantics = [#tpu.dimension_semantics<parallel>], iteration_bounds = array<i64: 1>, scalar_prefetch = 0 : i64, scratch_operands = 0 : i64, tpu.core_type = #tpu.core_type<tc>, window_params = [{transform_indices = @transform_0, window_bounds = array<i64: 16, 16>}, {pipeline_mode = #tpu.pipeline_mode<synchronous>, transform_indices = @transform_1, window_bounds = array<i64: 256, 256>}, {pipeline_mode = #tpu.pipeline_mode<synchronous>, transform_indices = @transform_2, window_bounds = array<i64: 1, 256>}, {pipeline_mode = #tpu.pipeline_mode<synchronous>, transform_indices = @transform_3, window_bounds = array<i64: 256, 256>}, {pipeline_mode = #tpu.pipeline_mode<synchronous>, transform_indices = @transform_4, window_bounds = array<i64: 1, 256>}, {pipeline_mode = #tpu.pipeline_mode<synchronous>, transform_indices = @transform_5, window_bounds = array<i64: 256, 256>}, {pipeline_mode = #tpu.pipeline_mode<synchronous>, transform_indices = @transform_6, window_bounds = array<i64: 1, 256>}, {transform_indices = @transform_7, window_bounds = array<i64: 16, 256>}]} {
    %c0 = arith.constant 0 : index
    %c0_0 = arith.constant 0 : index
    %0 = vector.load %arg1[%c0, %c0_0] : memref<16x16xf32, #tpu.memory_space<vmem>>, vector<16x16xf32>
    %1 = arith.truncf %0 : vector<16x16xf32> to vector<16x16xbf16>
    %c0_1 = arith.constant 0 : index
    %c0_2 = arith.constant 0 : index
    %2 = vector.load %arg2[%c0_1, %c0_2] : memref<256x256xbf16, #tpu.memory_space<vmem>>, vector<16x256xbf16>
    %cst = arith.constant dense<0.000000e+00> : vector<16x256xf32>
    %3 = tpu.matmul %1, %2, %cst {dimension_numbers = #tpu.dot_dimension_numbers<[1], [0], [0], [1], [0, 0, 1, 1], [], []>} : vector<16x16xbf16>, vector<16x256xbf16>, vector<16x256xf32> -> vector<16x256xf32>
    %c0_3 = arith.constant 0 : index
    %c0_4 = arith.constant 0 : index
    %4 = vector.load %arg3[%c0_3, %c0_4] : memref<1x256xf32, #tpu.memory_space<vmem>>, vector<1x256xf32>
    %5 = vector.broadcast %4 : vector<1x256xf32> to vector<16x256xf32>
    %6 = arith.addf %3, %5 : vector<16x256xf32>
    %7 = math.tanh %6 : vector<16x256xf32>
    %8 = arith.truncf %7 : vector<16x256xf32> to vector<16x256xbf16>
    %c0_5 = arith.constant 0 : index
    %c0_6 = arith.constant 0 : index
    %9 = vector.load %arg4[%c0_5, %c0_6] : memref<256x256xbf16, #tpu.memory_space<vmem>>, vector<256x256xbf16>
    %cst_7 = arith.constant dense<0.000000e+00> : vector<16x256xf32>
    %10 = tpu.matmul %8, %9, %cst_7 {dimension_numbers = #tpu.dot_dimension_numbers<[1], [0], [0], [1], [0, 0, 1, 1], [], []>} : vector<16x256xbf16>, vector<256x256xbf16>, vector<16x256xf32> -> vector<16x256xf32>
    %c0_8 = arith.constant 0 : index
    %c0_9 = arith.constant 0 : index
    %11 = vector.load %arg5[%c0_8, %c0_9] : memref<1x256xf32, #tpu.memory_space<vmem>>, vector<1x256xf32>
    %12 = vector.broadcast %11 : vector<1x256xf32> to vector<16x256xf32>
    %13 = arith.addf %10, %12 : vector<16x256xf32>
    %14 = math.tanh %13 : vector<16x256xf32>
    %15 = arith.truncf %14 : vector<16x256xf32> to vector<16x256xbf16>
    %c0_10 = arith.constant 0 : index
    %c0_11 = arith.constant 0 : index
    %16 = vector.load %arg6[%c0_10, %c0_11] : memref<256x256xbf16, #tpu.memory_space<vmem>>, vector<256x256xbf16>
    %cst_12 = arith.constant dense<0.000000e+00> : vector<16x256xf32>
    %17 = tpu.matmul %15, %16, %cst_12 {dimension_numbers = #tpu.dot_dimension_numbers<[1], [0], [0], [1], [0, 0, 1, 1], [], []>} : vector<16x256xbf16>, vector<256x256xbf16>, vector<16x256xf32> -> vector<16x256xf32>
    %c0_13 = arith.constant 0 : index
    %c0_14 = arith.constant 0 : index
    %18 = vector.load %arg7[%c0_13, %c0_14] : memref<1x256xf32, #tpu.memory_space<vmem>>, vector<1x256xf32>
    %19 = vector.broadcast %18 : vector<1x256xf32> to vector<16x256xf32>
    %20 = arith.addf %17, %19 : vector<16x256xf32>
    %c0_15 = arith.constant 0 : index
    %c0_16 = arith.constant 0 : index
    %21 = vector.load %arg8[%c0_15, %c0_16] : memref<16x256xf32, #tpu.memory_space<vmem>>, vector<16x256xf32>
    tpu.vector_store %arg8[%c0_15, %c0_16], %20 {strides = array<i32>} : memref<16x256xf32, #tpu.memory_space<vmem>>, vector<16x256xf32>,
    return
  }
  func.func @transform_0(%arg0: i32) -> (i32, i32) {
    %c0_i32 = arith.constant 0 : i32
    %c0_i32_0 = arith.constant 0 : i32
    return %arg0, %c0_i32 : i32, i32
  }
  func.func @transform_1(%arg0: i32) -> (i32, i32) {
    %c0_i32 = arith.constant 0 : i32
    %c0_i32_0 = arith.constant 0 : i32
    %c0_i32_1 = arith.constant 0 : i32
    return %c0_i32, %c0_i32_0 : i32, i32
  }
  func.func @transform_2(%arg0: i32) -> (i32, i32) {
    %c0_i32 = arith.constant 0 : i32
    %c0_i32_0 = arith.constant 0 : i32
    %c0_i32_1 = arith.constant 0 : i32
    return %c0_i32, %c0_i32_0 : i32, i32
  }
  func.func @transform_3(%arg0: i32) -> (i32, i32) {
    %c0_i32 = arith.constant 0 : i32
    %c0_i32_0 = arith.constant 0 : i32
    %c0_i32_1 = arith.constant 0 : i32
    return %c0_i32, %c0_i32_0 : i32, i32
  }
  func.func @transform_4(%arg0: i32) -> (i32, i32) {
    %c0_i32 = arith.constant 0 : i32
    %c0_i32_0 = arith.constant 0 : i32
    %c0_i32_1 = arith.constant 0 : i32
    return %c0_i32, %c0_i32_0 : i32, i32
  }
  func.func @transform_5(%arg0: i32) -> (i32, i32) {
    %c0_i32 = arith.constant 0 : i32
    %c0_i32_0 = arith.constant 0 : i32
    %c0_i32_1 = arith.constant 0 : i32
    return %c0_i32, %c0_i32_0 : i32, i32
  }
  func.func @transform_6(%arg0: i32) -> (i32, i32) {
    %c0_i32 = arith.constant 0 : i32
    %c0_i32_0 = arith.constant 0 : i32
    %c0_i32_1 = arith.constant 0 : i32
    return %c0_i32, %c0_i32_0 : i32, i32
  }
  func.func @transform_7(%arg0: i32) -> (i32, i32) {
    %c0_i32 = arith.constant 0 : i32
    %c0_i32_0 = arith.constant 0 : i32
    return %arg0, %c0_i32 : i32, i32
  }
}

</mosaic_0001>

<llo_original>
// kernel: _lambda_.1
$region0: #{_lambda_.1}
  #allocation0 [shape = 'u32[]', space=smem, size = 0x4, offset = 0x4, fixed_abs, tag = 'smem constant byte address 0x4 - core index']
  #allocation1 [shape = 'u32[144,128]{1,0:T(1,128)}', space=vmem, size = 0x12000, scoped, tag = 'internal scratch']
  %s0 = inlined_call_operand.vmem [shape: f32[16,16], index: 0, kind: input, shape index: {}]
  %s1 = inlined_call_operand.hbm [shape: bf16[256,256], index: 1, kind: input, shape index: {}]
  %s2 = inlined_call_operand.vmem [shape: f32[1,256], index: 2, kind: input, shape index: {}]
  %s3 = inlined_call_operand.hbm [shape: bf16[256,256], index: 3, kind: input, shape index: {}]
  %s4 = inlined_call_operand.vmem [shape: f32[1,256], index: 4, kind: input, shape index: {}]
  %s5 = inlined_call_operand.hbm [shape: bf16[256,256], index: 5, kind: input, shape index: {}]
  %s6 = inlined_call_operand.vmem [shape: f32[1,256], index: 6, kind: input, shape index: {}]
  %s7 = inlined_call_operand.vmem [shape: f32[16,256], index: 7, kind: output, shape index: {}]
  %s8 = sld [smem:[#allocation0]]
  $region50: #{_lambda_.1} parent=0
    _
  %s10 = ssub.s32 1, %s8
  %s11 = scalar_select 0, %s10, %s8
  $region1: #{_lambda_.1} parent=0
    #allocation2 [shape = 'u8[131072]{0}', space=vmem, size = 0x20000, scoped, tag = 'input window, operand 1, single buffered']
    #allocation3 [shape = 's32[1]{0}', space=sflag, size = 0x4, scoped, tag = 'scoped memory for _lambda_.1']
    #allocation4 [shape = 'u8[131072]{0}', space=vmem, size = 0x20000, scoped, tag = 'input window, operand 3, single buffered']
    #allocation5 [shape = 's32[1]{0}', space=sflag, size = 0x4, scoped, tag = 'scoped memory for _lambda_.1']
    #allocation6 [shape = 'u8[131072]{0}', space=vmem, size = 0x20000, scoped, tag = 'input window, operand 5, single buffered']
    %12 = vsyncpa [#allocation3], 0
    %13 = vsyncpa [#allocation5], 0
    // Predicated region
    $region2: #{_lambda_.1} parent=1 // pred_check
      _
    $region3: #{_lambda_.1} parent=1 // pred_check_branch
      %15 = sbr.rel (0) target = $region5
    $region4: #{_lambda_.1} parent=1 // pred_region
      _
    $region5: #{_lambda_.1} parent=1 // pred_fallthru
      _
    // Predicated region
    $region6: #{_lambda_.1} parent=1 // pred_check
      _
    $region7: #{_lambda_.1} parent=1 // pred_check_branch
      %17 = sbr.rel (0) target = $region9
    $region8: #{_lambda_.1} parent=1 // pred_region
      %s19 = ssub.s32 4096, 4096
      %20 = vsyncadd [#allocation3], %s19
      %s21 = sshll.u32 [#allocation2], 4
      %s22 = int_to_ptr.vmem [resolvable:$true] %s21
      %27 = dma.hbm_to_vmem [thread:$0]  %s1, 4096, %s22, [#allocation3], 128, 128, 8
    $region9: #{_lambda_.1} parent=1 // pred_fallthru
      _
    // Predicated region
    $region10: #{_lambda_.1} parent=1 // pred_check
      _
    $region11: #{_lambda_.1} parent=1 // pred_check_branch
      %29 = sbr.rel (0) target = $region13
    $region12: #{_lambda_.1} parent=1 // pred_region
      _
    $region13: #{_lambda_.1} parent=1 // pred_fallthru
      _
    // Predicated region
    $region14: #{_lambda_.1} parent=1 // pred_check
      _
    $region15: #{_lambda_.1} parent=1 // pred_check_branch
      %31 = sbr.rel (0) target = $region17
    $region16: #{_lambda_.1} parent=1 // pred_region
      %s33 = ssub.s32 4096, 4096
      %34 = vsyncadd [#allocation5], %s33
      %s35 = sshll.u32 [#allocation4], 4
      %s36 = int_to_ptr.vmem [resolvable:$true] %s35
      %41 = dma.hbm_to_vmem [thread:$0]  %s3, 4096, %s36, [#allocation5], 128, 128, 8
    $region17: #{_lambda_.1} parent=1 // pred_fallthru
      _
    // Predicated region
    $region18: #{_lambda_.1} parent=1 // pred_check
      _
    $region19: #{_lambda_.1} parent=1 // pred_check_branch
      %43 = sbr.rel (0) target = $region21
    $region20: #{_lambda_.1} parent=1 // pred_region
      _
    $region21: #{_lambda_.1} parent=1 // pred_fallthru
      _
    // Predicated region
    $region22: #{_lambda_.1} parent=1 // pred_check
      _
    $region23: #{_lambda_.1} parent=1 // pred_check_branch
      %45 = sbr.rel (0) target = $region25
    $region24: #{_lambda_.1} parent=1 // pred_region
      %s47 = ssub.s32 4096, 4096
      %48 = vsyncadd [#allocation5], %s47
      %s49 = sshll.u32 [#allocation6], 4
      %s50 = int_to_ptr.vmem [resolvable:$true] %s49
      %55 = dma.hbm_to_vmem [thread:$0]  %s5, 4096, %s50, [#allocation5], 128, 128, 8
    $region25: #{_lambda_.1} parent=1 // pred_fallthru
      _
    // Predicated region
    $region26: #{_lambda_.1} parent=1 // pred_check
      _
    $region27: #{_lambda_.1} parent=1 // pred_check_branch
      %57 = sbr.rel (0) target = $region29
    $region28: #{_lambda_.1} parent=1 // pred_region
      _
    $region29: #{_lambda_.1} parent=1 // pred_fallthru
      _
    // Predicated region
    $region30: #{_lambda_.1} parent=1 // pred_check
      _
    $region31: #{_lambda_.1} parent=1 // pred_check_branch
      %59 = sbr.rel (0) target = $region33
    $region32: #{_lambda_.1} parent=1 // pred_region
      %60 = dma.done [#allocation3], 4096
    $region33: #{_lambda_.1} parent=1 // pred_fallthru
      _
    // Predicated region
    $region34: #{_lambda_.1} parent=1 // pred_check
      _
    $region35: #{_lambda_.1} parent=1 // pred_check_branch
      %62 = sbr.rel (0) target = $region37
    $region36: #{_lambda_.1} parent=1 // pred_region
      %63 = dma.done [#allocation5], 4096
    $region37: #{_lambda_.1} parent=1 // pred_fallthru
      _
    // Predicated region
    $region38: #{_lambda_.1} parent=1 // pred_check
      _
    $region39: #{_lambda_.1} parent=1 // pred_check_branch
      %65 = sbr.rel (0) target = $region41
    $region40: #{_lambda_.1} parent=1 // pred_region
      %66 = dma.done [#allocation5], 4096
    $region41: #{_lambda_.1} parent=1 // pred_fallthru
      _
    %v68 = vld [vmem:[%s0] sm:$0xff]
    %v69 = vld [vmem:[%s0 + $0x8] sm:$0xff]
    %v70 = vpack.c.bf16 %v69, %v68
    %v71 = vld [vmem:[#allocation2] sm:$0xff]
    %v72 = vld [vmem:[#allocation2 + $0x8] sm:$0xff]
    %v73 = vld [vmem:[%s2] sm:$0x3]
    %v75 = vlaneseq
    %v76 = vshrl.u32 %v75, 7
    %v77 = vsub.s32 0, %v76
    %v78 = vrot.slane %v73, %v77
    %v79 = vlaneseq
    %v80 = vshrl.u32 %v79, 7
    %v81 = vsub.s32 1, %v80
    %v82 = vrot.slane %v73, %v81
    %v87 = vunpack.c.l.b16 %v71
    %v88 = vunpack.c.h.b16 %v71
    %v89 = vunpack.c.l.b16 %v72
    %v90 = vunpack.c.h.b16 %v72
    %v91 = vpack.c.b16 %v89, %v87
    %v92 = vpack.c.b16 %v90, %v88
    %vm95 = vcmask 130048
    %v97 = vsel %vm95, %v70, 0
    %99 = vmatprep.subr.bf16.mxu0 %v92
    %100 = vmatpush1.bf16.msra.mxu0 %v91
    %101 = vmatprep.subr.bf16.mxu0 0
    %102 = vmatpush1.bf16.msra.mxu0 0
    %103 = vmatprep.subr.bf16.mxu0 0
    %104 = vmatpush1.bf16.msra.mxu0 0
    %105 = vmatprep.subr.bf16.mxu0 0
    %106 = vmatpush1.bf16.msra.mxu0 0
    %107 = vmatprep.subr.bf16.mxu0 0
    %108 = vmatpush1.bf16.msra.mxu0 0
    %109 = vmatprep.subr.bf16.mxu0 0
    %110 = vmatpush1.bf16.msra.mxu0 0
    %111 = vmatprep.subr.bf16.mxu0 0
    %112 = vmatpush1.bf16.msra.mxu0 0
    %113 = vmatprep.subr.bf16.mxu0 0
    %114 = vmatpush1.bf16.msra.mxu0 0
    %115 = vmatprep.subr.bf16.mxu0 0
    %116 = vmatpush1.bf16.msra.mxu0 0
    %117 = vmatprep.subr.bf16.mxu0 0
    %118 = vmatpush1.bf16.msra.mxu0 0
    %119 = vmatprep.subr.bf16.mxu0 0
    %120 = vmatpush1.bf16.msra.mxu0 0
    %121 = vmatprep.subr.bf16.mxu0 0
    %122 = vmatpush1.bf16.msra.mxu0 0
    %123 = vmatprep.subr.bf16.mxu0 0
    %124 = vmatpush1.bf16.msra.mxu0 0
    %125 = vmatprep.subr.bf16.mxu0 0
    %126 = vmatpush1.bf16.msra.mxu0 0
    %127 = vmatprep.subr.bf16.mxu0 0
    %128 = vmatpush1.bf16.msra.mxu0 0
    %129 = vmatprep.subr.bf16.mxu0 0
    %130 = vmatpush1.bf16.msra.mxu0 0
    %131 = vmatprep.mubr.bf16.mxu0 0
    %132 = vmatmul.mubr.bf16.gmra.mrb[0].mxu0 %v97
    %v133 = vpop.f32.mrb[0].mxu0
    %v134 = vadd.f32 %v78, %v133
    %v135 = vpop.f32.mrb[0].mxu0
    %v136 = vadd.f32 %v82, %v135
    %v137 = vpop.f32.mrb[0].mxu0
    %v138 = vadd.f32 %v78, %v137
    %v139 = vpop.f32.mrb[0].mxu0
    %v140 = vadd.f32 %v82, %v139
    %141 = vdwg.mxu0
    %v142 = vtanh.pop %v134
    %v143 = vtanh.pop %v136
    %v144 = vtanh.pop %v138
    %v145 = vtanh.pop %v140
    %v146 = vpack.c.bf16 %v144, %v142
    %v147 = vpack.c.bf16 %v145, %v143
    %v148 = vld [vmem:[#allocation4] sm:$0xff]
    %v149 = vld [vmem:[#allocation4 + $0x8] sm:$0xff]
    %v150 = vld [vmem:[#allocation4 + $0x10] sm:$0xff]
    %v151 = vld [vmem:[#allocation4 + $0x18] sm:$0xff]
    %v152 = vld [vmem:[#allocation4 + $0x20] sm:$0xff]
    %v153 = vld [vmem:[#allocation4 + $0x28] sm:$0xff]
    %v154 = vld [vmem:[#allocation4 + $0x30] sm:$0xff]
    %v155 = vld [vmem:[#allocation4 + $0x38] sm:$0xff]
    %v156 = vld [vmem:[#allocation4 + $0x40] sm:$0xff]
    %v157 = vld [vmem:[#allocation4 + $0x48] sm:$0xff]
    %v158 = vld [vmem:[#allocation4 + $0x50] sm:$0xff]
    %v159 = vld [vmem:[#allocation4 + $0x58] sm:$0xff]
    %v160 = vld [vmem:[#allocation4 + $0x60] sm:$0xff]
    %v161 = vld [vmem:[#allocation4 + $0x68] sm:$0xff]
    %v162 = vld [vmem:[#allocation4 + $0x70] sm:$0xff]
    %v163 = vld [vmem:[#allocation4 + $0x78] sm:$0xff]
    %v164 = vld [vmem:[#allocation4 + $0x80] sm:$0xff]
    %v165 = vld [vmem:[#allocation4 + $0x88] sm:$0xff]
    %v166 = vld [vmem:[#allocation4 + $0x90] sm:$0xff]
    %v167 = vld [vmem:[#allocation4 + $0x98] sm:$0xff]
    %v168 = vld [vmem:[#allocation4 + $0xa0] sm:$0xff]
    %v169 = vld [vmem:[#allocation4 + $0xa8] sm:$0xff]
    %v170 = vld [vmem:[#allocation4 + $0xb0] sm:$0xff]
    %v171 = vld [vmem:[#allocation4 + $0xb8] sm:$0xff]
    %v172 = vld [vmem:[#allocation4 + $0xc0] sm:$0xff]
    %v173 = vld [vmem:[#allocation4 + $0xc8] sm:$0xff]
    %v174 = vld [vmem:[#allocation4 + $0xd0] sm:$0xff]
    %v175 = vld [vmem:[#allocation4 + $0xd8] sm:$0xff]
    %v176 = vld [vmem:[#allocation4 + $0xe0] sm:$0xff]
    %v177 = vld [vmem:[#allocation4 + $0xe8] sm:$0xff]
    %v178 = vld [vmem:[#allocation4 + $0xf0] sm:$0xff]
    %v179 = vld [vmem:[#allocation4 + $0xf8] sm:$0xff]
    %v180 = vld [vmem:[%s4] sm:$0x3]
    %v182 = vlaneseq
    %v183 = vshrl.u32 %v182, 7
    %v184 = vsub.s32 0, %v183
    %v185 = vrot.slane %v180, %v184
    %v186 = vlaneseq
    %v187 = vshrl.u32 %v186, 7
    %v188 = vsub.s32 1, %v187
    %v189 = vrot.slane %v180, %v188
    %v224 = vunpack.c.l.b16 %v148
    %v225 = vunpack.c.h.b16 %v148
    %v226 = vunpack.c.l.b16 %v149
    %v227 = vunpack.c.h.b16 %v149
    %v228 = vunpack.c.l.b16 %v150
    %v229 = vunpack.c.h.b16 %v150
    %v230 = vunpack.c.l.b16 %v151
    %v231 = vunpack.c.h.b16 %v151
    %v232 = vunpack.c.l.b16 %v152
    %v233 = vunpack.c.h.b16 %v152
    %v234 = vunpack.c.l.b16 %v153
    %v235 = vunpack.c.h.b16 %v153
    %v236 = vunpack.c.l.b16 %v154
    %v237 = vunpack.c.h.b16 %v154
    %v238 = vunpack.c.l.b16 %v155
    %v239 = vunpack.c.h.b16 %v155
    %v240 = vunpack.c.l.b16 %v156
    %v241 = vunpack.c.h.b16 %v156
    %v242 = vunpack.c.l.b16 %v157
    %v243 = vunpack.c.h.b16 %v157
    %v244 = vunpack.c.l.b16 %v158
    %v245 = vunpack.c.h.b16 %v158
    %v246 = vunpack.c.l.b16 %v159
    %v247 = vunpack.c.h.b16 %v159
    %v248 = vunpack.c.l.b16 %v160
    %v249 = vunpack.c.h.b16 %v160
    %v250 = vunpack.c.l.b16 %v161
    %v251 = vunpack.c.h.b16 %v161
    %v252 = vunpack.c.l.b16 %v162
    %v253 = vunpack.c.h.b16 %v162
    %v254 = vunpack.c.l.b16 %v163
    %v255 = vunpack.c.h.b16 %v163
    %v256 = vunpack.c.l.b16 %v164
    %v257 = vunpack.c.h.b16 %v164
    %v258 = vunpack.c.l.b16 %v165
    %v259 = vunpack.c.h.b16 %v165
    %v260 = vunpack.c.l.b16 %v166
    %v261 = vunpack.c.h.b16 %v166
    %v262 = vunpack.c.l.b16 %v167
    %v263 = vunpack.c.h.b16 %v167
    %v264 = vunpack.c.l.b16 %v168
    %v265 = vunpack.c.h.b16 %v168
    %v266 = vunpack.c.l.b16 %v169
    %v267 = vunpack.c.h.b16 %v169
    %v268 = vunpack.c.l.b16 %v170
    %v269 = vunpack.c.h.b16 %v170
    %v270 = vunpack.c.l.b16 %v171
    %v271 = vunpack.c.h.b16 %v171
    %v272 = vunpack.c.l.b16 %v172
    %v273 = vunpack.c.h.b16 %v172
    %v274 = vunpack.c.l.b16 %v173
    %v275 = vunpack.c.h.b16 %v173
    %v276 = vunpack.c.l.b16 %v174
    %v277 = vunpack.c.h.b16 %v174
    %v278 = vunpack.c.l.b16 %v175
    %v279 = vunpack.c.h.b16 %v175
    %v280 = vunpack.c.l.b16 %v176
    %v281 = vunpack.c.h.b16 %v176
    %v282 = vunpack.c.l.b16 %v177
    %v283 = vunpack.c.h.b16 %v177
    %v284 = vunpack.c.l.b16 %v178
    %v285 = vunpack.c.h.b16 %v178
    %v286 = vunpack.c.l.b16 %v179
    %v287 = vunpack.c.h.b16 %v179
    %v288 = vpack.c.b16 %v226, %v224
    %v289 = vpack.c.b16 %v227, %v225
    %v290 = vpack.c.b16 %v230, %v228
    %v291 = vpack.c.b16 %v231, %v229
    %v292 = vpack.c.b16 %v234, %v232
    %v293 = vpack.c.b16 %v235, %v233
    %v294 = vpack.c.b16 %v238, %v236
    %v295 = vpack.c.b16 %v239, %v237
    %v296 = vpack.c.b16 %v242, %v240
    %v297 = vpack.c.b16 %v243, %v241
    %v298 = vpack.c.b16 %v246, %v244
    %v299 = vpack.c.b16 %v247, %v245
    %v300 = vpack.c.b16 %v250, %v248
    %v301 = vpack.c.b16 %v251, %v249
    %v302 = vpack.c.b16 %v254, %v252
    %v303 = vpack.c.b16 %v255, %v253
    %v304 = vpack.c.b16 %v258, %v256
    %v305 = vpack.c.b16 %v259, %v257
    %v306 = vpack.c.b16 %v262, %v260
    %v307 = vpack.c.b16 %v263, %v261
    %v308 = vpack.c.b16 %v266, %v264
    %v309 = vpack.c.b16 %v267, %v265
    %v310 = vpack.c.b16 %v270, %v268
    %v311 = vpack.c.b16 %v271, %v269
    %v312 = vpack.c.b16 %v274, %v272
    %v313 = vpack.c.b16 %v275, %v273
    %v314 = vpack.c.b16 %v278, %v276
    %v315 = vpack.c.b16 %v279, %v277
    %v316 = vpack.c.b16 %v282, %v280
    %v317 = vpack.c.b16 %v283, %v281
    %v318 = vpack.c.b16 %v286, %v284
    %v319 = vpack.c.b16 %v287, %v285
    %352 = vmatprep.subr.bf16.mxu0 %v289
    %353 = vmatpush1.bf16.msra.mxu0 %v288
    %354 = vmatprep.subr.bf16.mxu0 %v291
    %355 = vmatpush1.bf16.msra.mxu0 %v290
    %356 = vmatprep.subr.bf16.mxu0 %v293
    %357 = vmatpush1.bf16.msra.mxu0 %v292
    %358 = vmatprep.subr.bf16.mxu0 %v295
    %359 = vmatpush1.bf16.msra.mxu0 %v294
    %360 = vmatprep.subr.bf16.mxu0 %v297
    %361 = vmatpush1.bf16.msra.mxu0 %v296
    %362 = vmatprep.subr.bf16.mxu0 %v299
    %363 = vmatpush1.bf16.msra.mxu0 %v298
    %364 = vmatprep.subr.bf16.mxu0 %v301
    %365 = vmatpush1.bf16.msra.mxu0 %v300
    %366 = vmatprep.subr.bf16.mxu0 %v303
    %367 = vmatpush1.bf16.msra.mxu0 %v302
    %368 = vmatprep.subr.bf16.mxu0 %v305
    %369 = vmatpush1.bf16.msra.mxu0 %v304
    %370 = vmatprep.subr.bf16.mxu0 %v307
    %371 = vmatpush1.bf16.msra.mxu0 %v306
    %372 = vmatprep.subr.bf16.mxu0 %v309
    %373 = vmatpush1.bf16.msra.mxu0 %v308
    %374 = vmatprep.subr.bf16.mxu0 %v311
    %375 = vmatpush1.bf16.msra.mxu0 %v310
    %376 = vmatprep.subr.bf16.mxu0 %v313
    %377 = vmatpush1.bf16.msra.mxu0 %v312
    %378 = vmatprep.subr.bf16.mxu0 %v315
    %379 = vmatpush1.bf16.msra.mxu0 %v314
    %380 = vmatprep.subr.bf16.mxu0 %v317
    %381 = vmatpush1.bf16.msra.mxu0 %v316
    %382 = vmatprep.subr.bf16.mxu0 %v319
    %383 = vmatpush1.bf16.msra.mxu0 %v318
    %384 = vmatprep.mubr.bf16.mxu0 %v147
    %385 = vmatmul.mubr.bf16.gmra.mrb[0].mxu0 %v146
    %v386 = vpop.f32.mrb[0].mxu0
    %v387 = vadd.f32 %v185, %v386
    %v388 = vpop.f32.mrb[0].mxu0
    %v389 = vadd.f32 %v189, %v388
    %v390 = vpop.f32.mrb[0].mxu0
    %v391 = vadd.f32 %v185, %v390
    %v392 = vpop.f32.mrb[0].mxu0
    %v393 = vadd.f32 %v189, %v392
    %394 = vdwg.mxu0
    %v395 = vtanh.pop %v387
    %v396 = vtanh.pop %v389
    %v397 = vtanh.pop %v391
    %v398 = vtanh.pop %v393
    %v399 = vpack.c.bf16 %v397, %v395
    %v400 = vpack.c.bf16 %v398, %v396
    %v401 = vld [vmem:[#allocation6] sm:$0xff]
    %v402 = vld [vmem:[#allocation6 + $0x8] sm:$0xff]
    %v403 = vld [vmem:[#allocation6 + $0x10] sm:$0xff]
    %v404 = vld [vmem:[#allocation6 + $0x18] sm:$0xff]
    %v405 = vld [vmem:[#allocation6 + $0x20] sm:$0xff]
    %v406 = vld [vmem:[#allocation6 + $0x28] sm:$0xff]
    %v407 = vld [vmem:[#allocation6 + $0x30] sm:$0xff]
    %v408 = vld [vmem:[#allocation6 + $0x38] sm:$0xff]
    %v409 = vld [vmem:[#allocation6 + $0x40] sm:$0xff]
    %v410 = vld [vmem:[#allocation6 + $0x48] sm:$0xff]
    %v411 = vld [vmem:[#allocation6 + $0x50] sm:$0xff]
    %v412 = vld [vmem:[#allocation6 + $0x58] sm:$0xff]
    %v413 = vld [vmem:[#allocation6 + $0x60] sm:$0xff]
    %v414 = vld [vmem:[#allocation6 + $0x68] sm:$0xff]
    %v415 = vld [vmem:[#allocation6 + $0x70] sm:$0xff]
    %v416 = vld [vmem:[#allocation6 + $0x78] sm:$0xff]
    %v417 = vld [vmem:[#allocation6 + $0x80] sm:$0xff]
    %v418 = vld [vmem:[#allocation6 + $0x88] sm:$0xff]
    %v419 = vld [vmem:[#allocation6 + $0x90] sm:$0xff]
    %v420 = vld [vmem:[#allocation6 + $0x98] sm:$0xff]
    %v421 = vld [vmem:[#allocation6 + $0xa0] sm:$0xff]
    %v422 = vld [vmem:[#allocation6 + $0xa8] sm:$0xff]
    %v423 = vld [vmem:[#allocation6 + $0xb0] sm:$0xff]
    %v424 = vld [vmem:[#allocation6 + $0xb8] sm:$0xff]
    %v425 = vld [vmem:[#allocation6 + $0xc0] sm:$0xff]
    %v426 = vld [vmem:[#allocation6 + $0xc8] sm:$0xff]
    %v427 = vld [vmem:[#allocation6 + $0xd0] sm:$0xff]
    %v428 = vld [vmem:[#allocation6 + $0xd8] sm:$0xff]
    %v429 = vld [vmem:[#allocation6 + $0xe0] sm:$0xff]
    %v430 = vld [vmem:[#allocation6 + $0xe8] sm:$0xff]
    %v431 = vld [vmem:[#allocation6 + $0xf0] sm:$0xff]
    %v432 = vld [vmem:[#allocation6 + $0xf8] sm:$0xff]
    %v433 = vld [vmem:[%s6] sm:$0x3]
    %v435 = vlaneseq
    %v436 = vshrl.u32 %v435, 7
    %v437 = vsub.s32 0, %v436
    %v438 = vrot.slane %v433, %v437
    %v439 = vlaneseq
    %v440 = vshrl.u32 %v439, 7
    %v441 = vsub.s32 1, %v440
    %v442 = vrot.slane %v433, %v441
    %v477 = vunpack.c.l.b16 %v401
    %v478 = vunpack.c.h.b16 %v401
    %v479 = vunpack.c.l.b16 %v402
    %v480 = vunpack.c.h.b16 %v402
    %v481 = vunpack.c.l.b16 %v403
    %v482 = vunpack.c.h.b16 %v403
    %v483 = vunpack.c.l.b16 %v404
    %v484 = vunpack.c.h.b16 %v404
    %v485 = vunpack.c.l.b16 %v405
    %v486 = vunpack.c.h.b16 %v405
    %v487 = vunpack.c.l.b16 %v406
    %v488 = vunpack.c.h.b16 %v406
    %v489 = vunpack.c.l.b16 %v407
    %v490 = vunpack.c.h.b16 %v407
    %v491 = vunpack.c.l.b16 %v408
    %v492 = vunpack.c.h.b16 %v408
    %v493 = vunpack.c.l.b16 %v409
    %v494 = vunpack.c.h.b16 %v409
    %v495 = vunpack.c.l.b16 %v410
    %v496 = vunpack.c.h.b16 %v410
    %v497 = vunpack.c.l.b16 %v411
    %v498 = vunpack.c.h.b16 %v411
    %v499 = vunpack.c.l.b16 %v412
    %v500 = vunpack.c.h.b16 %v412
    %v501 = vunpack.c.l.b16 %v413
    %v502 = vunpack.c.h.b16 %v413
    %v503 = vunpack.c.l.b16 %v414
    %v504 = vunpack.c.h.b16 %v414
    %v505 = vunpack.c.l.b16 %v415
    %v506 = vunpack.c.h.b16 %v415
    %v507 = vunpack.c.l.b16 %v416
    %v508 = vunpack.c.h.b16 %v416
    %v509 = vunpack.c.l.b16 %v417
    %v510 = vunpack.c.h.b16 %v417
    %v511 = vunpack.c.l.b16 %v418
    %v512 = vunpack.c.h.b16 %v418
    %v513 = vunpack.c.l.b16 %v419
    %v514 = vunpack.c.h.b16 %v419
    %v515 = vunpack.c.l.b16 %v420
    %v516 = vunpack.c.h.b16 %v420
    %v517 = vunpack.c.l.b16 %v421
    %v518 = vunpack.c.h.b16 %v421
    %v519 = vunpack.c.l.b16 %v422
    %v520 = vunpack.c.h.b16 %v422
    %v521 = vunpack.c.l.b16 %v423
    %v522 = vunpack.c.h.b16 %v423
    %v523 = vunpack.c.l.b16 %v424
    %v524 = vunpack.c.h.b16 %v424
    %v525 = vunpack.c.l.b16 %v425
    %v526 = vunpack.c.h.b16 %v425
    %v527 = vunpack.c.l.b16 %v426
    %v528 = vunpack.c.h.b16 %v426
    %v529 = vunpack.c.l.b16 %v427
    %v530 = vunpack.c.h.b16 %v427
    %v531 = vunpack.c.l.b16 %v428
    %v532 = vunpack.c.h.b16 %v428
    %v533 = vunpack.c.l.b16 %v429
    %v534 = vunpack.c.h.b16 %v429
    %v535 = vunpack.c.l.b16 %v430
    %v536 = vunpack.c.h.b16 %v430
    %v537 = vunpack.c.l.b16 %v431
    %v538 = vunpack.c.h.b16 %v431
    %v539 = vunpack.c.l.b16 %v432
    %v540 = vunpack.c.h.b16 %v432
    %v541 = vpack.c.b16 %v479, %v477
    %v542 = vpack.c.b16 %v480, %v478
    %v543 = vpack.c.b16 %v483, %v481
    %v544 = vpack.c.b16 %v484, %v482
    %v545 = vpack.c.b16 %v487, %v485
    %v546 = vpack.c.b16 %v488, %v486
    %v547 = vpack.c.b16 %v491, %v489
    %v548 = vpack.c.b16 %v492, %v490
    %v549 = vpack.c.b16 %v495, %v493
    %v550 = vpack.c.b16 %v496, %v494
    %v551 = vpack.c.b16 %v499, %v497
    %v552 = vpack.c.b16 %v500, %v498
    %v553 = vpack.c.b16 %v503, %v501
    %v554 = vpack.c.b16 %v504, %v502
    %v555 = vpack.c.b16 %v507, %v505
    %v556 = vpack.c.b16 %v508, %v506
    %v557 = vpack.c.b16 %v511, %v509
    %v558 = vpack.c.b16 %v512, %v510
    %v559 = vpack.c.b16 %v515, %v513
    %v560 = vpack.c.b16 %v516, %v514
    %v561 = vpack.c.b16 %v519, %v517
    %v562 = vpack.c.b16 %v520, %v518
    %v563 = vpack.c.b16 %v523, %v521
    %v564 = vpack.c.b16 %v524, %v522
    %v565 = vpack.c.b16 %v527, %v525
    %v566 = vpack.c.b16 %v528, %v526
    %v567 = vpack.c.b16 %v531, %v529
    %v568 = vpack.c.b16 %v532, %v530
    %v569 = vpack.c.b16 %v535, %v533
    %v570 = vpack.c.b16 %v536, %v534
    %v571 = vpack.c.b16 %v539, %v537
    %v572 = vpack.c.b16 %v540, %v538
    %605 = vmatprep.subr.bf16.mxu0 %v542
    %606 = vmatpush1.bf16.msra.mxu0 %v541
    %607 = vmatprep.subr.bf16.mxu0 %v544
    %608 = vmatpush1.bf16.msra.mxu0 %v543
    %609 = vmatprep.subr.bf16.mxu0 %v546
    %610 = vmatpush1.bf16.msra.mxu0 %v545
    %611 = vmatprep.subr.bf16.mxu0 %v548
    %612 = vmatpush1.bf16.msra.mxu0 %v547
    %613 = vmatprep.subr.bf16.mxu0 %v550
    %614 = vmatpush1.bf16.msra.mxu0 %v549
    %615 = vmatprep.subr.bf16.mxu0 %v552
    %616 = vmatpush1.bf16.msra.mxu0 %v551
    %617 = vmatprep.subr.bf16.mxu0 %v554
    %618 = vmatpush1.bf16.msra.mxu0 %v553
    %619 = vmatprep.subr.bf16.mxu0 %v556
    %620 = vmatpush1.bf16.msra.mxu0 %v555
    %621 = vmatprep.subr.bf16.mxu0 %v558
    %622 = vmatpush1.bf16.msra.mxu0 %v557
    %623 = vmatprep.subr.bf16.mxu0 %v560
    %624 = vmatpush1.bf16.msra.mxu0 %v559
    %625 = vmatprep.subr.bf16.mxu0 %v562
    %626 = vmatpush1.bf16.msra.mxu0 %v561
    %627 = vmatprep.subr.bf16.mxu0 %v564
    %628 = vmatpush1.bf16.msra.mxu0 %v563
    %629 = vmatprep.subr.bf16.mxu0 %v566
    %630 = vmatpush1.bf16.msra.mxu0 %v565
    %631 = vmatprep.subr.bf16.mxu0 %v568
    %632 = vmatpush1.bf16.msra.mxu0 %v567
    %633 = vmatprep.subr.bf16.mxu0 %v570
    %634 = vmatpush1.bf16.msra.mxu0 %v569
    %635 = vmatprep.subr.bf16.mxu0 %v572
    %636 = vmatpush1.bf16.msra.mxu0 %v571
    %637 = vmatprep.mubr.bf16.mxu0 %v400
    %638 = vmatmul.mubr.bf16.gmra.mrb[0].mxu0 %v399
    %v639 = vpop.f32.mrb[0].mxu0
    %v640 = vadd.f32 %v438, %v639
    %v641 = vpop.f32.mrb[0].mxu0
    %v642 = vadd.f32 %v442, %v641
    %v643 = vpop.f32.mrb[0].mxu0
    %v644 = vadd.f32 %v438, %v643
    %v645 = vpop.f32.mrb[0].mxu0
    %v646 = vadd.f32 %v442, %v645
    %647 = vdwg.mxu0
    %648 = vst [vmem:[%s7] sm:$0xff] %v640
    %649 = vst [vmem:[%s7 + $0x8] sm:$0xff] %v642
    %650 = vst [vmem:[%s7 + $0x10] sm:$0xff] %v644
    %651 = vst [vmem:[%s7 + $0x18] sm:$0xff] %v646
    // Predicated region
    $region42: #{_lambda_.1} parent=1 // pred_check
      _
    $region43: #{_lambda_.1} parent=1 // pred_check_branch
      %653 = sbr.rel (0) target = $region45
    $region44: #{_lambda_.1} parent=1 // pred_region
      _
    $region45: #{_lambda_.1} parent=1 // pred_fallthru
      _
    // Predicated region
    $region46: #{_lambda_.1} parent=1 // pred_check
      _
    $region47: #{_lambda_.1} parent=1 // pred_check_branch
      %655 = sbr.rel (0) target = $region49
    $region48: #{_lambda_.1} parent=1 // pred_region
      _
    $region49: #{_lambda_.1} parent=1 // pred_fallthru
      _
    %656 = vsyncpa [#allocation3], 1
    %657 = vsyncpa [#allocation5], 1

</llo_original>
